<compile_context>
chip_gen: v6e
topology: v6e:2x2x1
jax: 0.10.0
libtpu: 0.0.40
codegen_flags: <defaults>
</compile_context>

<pallas_src>
import jax
import jax.numpy as jnp
from jax.experimental import pallas as pl
from jax.experimental.pallas import tpu as pltpu

# ----- problem sizes (small, synthetic) -----
N = 64          # batch rows
D_IN = 32       # input_d
D_H = 32        # hidden_d
D_OUT = 16      # output_d
LN_EPS = 1e-5


def _layernorm(x, gamma, beta, eps=LN_EPS):
    # var = E[x^2] - E[x]^2 : the two reductions are independent (issue
    # back-to-back into the XLU); clamp to >= 0 to guard against cancellation.
    mu = jnp.mean(x, axis=-1, keepdims=True)
    ms = jnp.mean(x * x, axis=-1, keepdims=True)
    var = jnp.maximum(ms - mu * mu, 0.0)
    return (x - mu) * jax.lax.rsqrt(var + eps) * gamma + beta


def mlp_kernel(x_ref, w01_ref, vecs_ref, wfin_ref, bfin_ref, o_ref):
    # vecs_ref rows: 0=b0, 1=g0, 2=be0, 3=b1, 4=g1, 5=be1, 6..7=padding
    feat = x_ref[...].astype(jnp.float32)

    # layer 0: Linear(input_d -> hidden_d) + LayerNorm + ReLU
    h = jnp.dot(feat, w01_ref[0], preferred_element_type=jnp.float32) + vecs_ref[0]
    h = _layernorm(h, vecs_ref[1], vecs_ref[2])
    h = jnp.maximum(h, 0.0)
    # dropout p=0.0 (eval) -> identity
    # TODO(synk): stochastic dropout (training mode, p>0) not implemented here.

    # layer 1: Linear(hidden_d -> hidden_d) + LayerNorm + ReLU
    h = jnp.dot(h, w01_ref[1], preferred_element_type=jnp.float32) + vecs_ref[3]
    h = _layernorm(h, vecs_ref[4], vecs_ref[5])
    h = jnp.maximum(h, 0.0)

    # final layer + skip as two accumulating matmuls (no lane concat):
    #   out = h @ w2 + feat @ wsk + (b2 + bsk)
    out = (jnp.dot(h, wfin_ref[0], preferred_element_type=jnp.float32)
           + jnp.dot(feat, wfin_ref[1], preferred_element_type=jnp.float32)
           + bfin_ref[...])
    o_ref[...] = out.astype(o_ref.dtype)


def mlp_forward(x, packed_params):
    """Forward pass. `packed_params` comes from pack_params() (one-time prep)."""
    w01, vecs, wfin, bfin = packed_params
    n = x.shape[0]

    def vmem():
        return pl.BlockSpec(memory_space=pltpu.MemorySpace.VMEM)

    # 2 x (64x32x32) + 2 x (64x32x16) matmuls + LN/ReLU elementwise; 2 rsqrt/row.
    cost = pl.CostEstimate(flops=420_000, transcendentals=2 * n,
                           bytes_accessed=26_000)

    return pl.pallas_call(
        mlp_kernel,
        out_shape=jax.ShapeDtypeStruct((n, D_OUT), jnp.float32),
        in_specs=[vmem() for _ in range(5)],
        out_specs=vmem(),
        cost_estimate=cost,
    )(x, w01, vecs, wfin, bfin)


def _xavier_normal(key, fan_out, fan_in):
    # matches nn.init.xavier_normal_ on a (out, in) weight; returned transposed (in, out)
    std = (2.0 / (fan_in + fan_out)) ** 0.5
    w = std * jax.random.normal(key, (fan_out, fan_in), dtype=jnp.float32)
    return w.T


def make_params(key):
    k0, k1, k2, k3 = jax.random.split(key, 4)
    w0 = _xavier_normal(k0, D_H, D_IN);    b0 = jnp.zeros((1, D_H), jnp.float32)
    w1 = _xavier_normal(k1, D_H, D_H);     b1 = jnp.zeros((1, D_H), jnp.float32)
    w2 = _xavier_normal(k2, D_OUT, D_H);   b2 = jnp.zeros((1, D_OUT), jnp.float32)
    wsk = _xavier_normal(k3, D_OUT, D_IN); bsk = jnp.zeros((1, D_OUT), jnp.float32)
    g0 = jnp.ones((1, D_H), jnp.float32);  be0 = jnp.zeros((1, D_H), jnp.float32)
    g1 = jnp.ones((1, D_H), jnp.float32);  be1 = jnp.zeros((1, D_H), jnp.float32)
    return (w0, b0, g0, be0, w1, b1, g1, be1, w2, b2, wsk, bsk)


def pack_params(params):
    """One-time parameter prep, hoisted out of the per-call forward path."""
    (w0, b0, g0, be0, w1, b1, g1, be1, w2, b2, wsk, bsk) = params
    w01 = jnp.stack([w0, w1], axis=0)                            # (2, 32, 32)
    vecs = jnp.concatenate(
        [b0, g0, be0, b1, g1, be1, jnp.zeros((2, D_H), jnp.float32)], axis=0
    )                                                            # (8, 32)
    wfin = jnp.stack([w2, wsk], axis=0)                          # (2, 32, 16)
    bfin = b2 + bsk                                              # (1, 16)
    return (w01, vecs, wfin, bfin)


def _ln_ref(x, gamma, beta, eps=LN_EPS):
    mu = jnp.mean(x, axis=-1, keepdims=True)
    var = jnp.mean((x - mu) ** 2, axis=-1, keepdims=True)
    return (x - mu) * jax.lax.rsqrt(var + eps) * gamma + beta


def mlp_reference(x, params):
    (w0, b0, g0, be0, w1, b1, g1, be1, w2, b2, wsk, bsk) = params
    feat = x
    h = x @ w0 + b0
    h = _ln_ref(h, g0, be0)
    h = jnp.maximum(h, 0.0)
    h = h @ w1 + b1
    h = _ln_ref(h, g1, be1)
    h = jnp.maximum(h, 0.0)
    out = h @ w2 + b2
    return out + feat @ wsk + bsk


if __name__ == "__main__":
    key = jax.random.PRNGKey(0)
    kx, kp = jax.random.split(key)
    x = jax.random.normal(kx, (N, D_IN), dtype=jnp.float32)

    params = make_params(kp)
    packed = jax.block_until_ready(pack_params(params))   # one-time prep

    out = mlp_forward(x, packed)
    out = jax.block_until_ready(out)

    ref = mlp_reference(x, params)
    assert out.shape == (N, D_OUT)
    assert jnp.allclose(out, ref, atol=1e-4, rtol=1e-4), "mismatch vs reference"

    print("KERNEL_OK")
</pallas_src>

<mosaic_0001>
module attributes {stable_mosaic.version = 11 : i64} {
  func.func @mlp_kernel(%arg0: memref<64x32xf32, #tpu.memory_space<vmem>>, %arg1: memref<2x32x32xf32, #tpu.memory_space<vmem>>, %arg2: memref<8x32xf32, #tpu.memory_space<vmem>>, %arg3: memref<2x32x16xf32, #tpu.memory_space<vmem>>, %arg4: memref<1x16xf32, #tpu.memory_space<vmem>>, %arg5: memref<64x16xf32, #tpu.memory_space<vmem>>) attributes {dimension_semantics = [], scalar_prefetch = 0 : i64, scratch_operands = 0 : i64, tpu.core_type = #tpu.core_type<tc>} {
    %c0 = arith.constant 0 : index
    %c0_0 = arith.constant 0 : index
    %0 = vector.load %arg0[%c0, %c0_0] : memref<64x32xf32, #tpu.memory_space<vmem>>, vector<64x32xf32>
    %c0_1 = arith.constant 0 : index
    %c0_2 = arith.constant 0 : index
    %c0_3 = arith.constant 0 : index
    %1 = vector.load %arg1[%c0_1, %c0_2, %c0_3] : memref<2x32x32xf32, #tpu.memory_space<vmem>>, vector<1x32x32xf32>
    %2 = vector.shape_cast %1 : vector<1x32x32xf32> to vector<32x32xf32>
    %cst = arith.constant dense<0.000000e+00> : vector<64x32xf32>
    %3 = tpu.matmul %0, %2, %cst {dimension_numbers = #tpu.dot_dimension_numbers<[1], [0], [0], [1], [0, 0, 1, 1], [], []>} : vector<64x32xf32>, vector<32x32xf32>, vector<64x32xf32> -> vector<64x32xf32>
    %c0_4 = arith.constant 0 : index
    %c0_5 = arith.constant 0 : index
    %4 = vector.load %arg2[%c0_4, %c0_5] : memref<8x32xf32, #tpu.memory_space<vmem>>, vector<1x32xf32>
    %5 = vector.shape_cast %4 : vector<1x32xf32> to vector<32xf32>
    %6 = vector.shape_cast %5 : vector<32xf32> to vector<1x32xf32>
    %7 = vector.broadcast %6 : vector<1x32xf32> to vector<64x32xf32>
    %8 = arith.addf %3, %7 : vector<64x32xf32>
    %c1 = arith.constant 1 : index
    %c0_6 = arith.constant 0 : index
    %9 = vector.load %arg2[%c1, %c0_6] : memref<8x32xf32, #tpu.memory_space<vmem>>, vector<1x32xf32>
    %10 = vector.shape_cast %9 : vector<1x32xf32> to vector<32xf32>
    %c2 = arith.constant 2 : index
    %c0_7 = arith.constant 0 : index
    %11 = vector.load %arg2[%c2, %c0_7] : memref<8x32xf32, #tpu.memory_space<vmem>>, vector<1x32xf32>
    %12 = vector.shape_cast %11 : vector<1x32xf32> to vector<32xf32>
    %cst_8 = arith.constant dense<0.000000e+00> : vector<64xf32>
    %13 = vector.multi_reduction <add>, %8, %cst_8 [1] : vector<64x32xf32> to vector<64xf32>
    %14 = vector.shape_cast %13 : vector<64xf32> to vector<64x1xf32>
    %cst_9 = arith.constant 3.200000e+01 : f32
    %15 = vector.broadcast %cst_9 : f32 to vector<64x1xf32>
    %16 = arith.divf %14, %15 : vector<64x1xf32>
    %17 = arith.mulf %8, %8 : vector<64x32xf32>
    %cst_10 = arith.constant dense<0.000000e+00> : vector<64xf32>
    %18 = vector.multi_reduction <add>, %17, %cst_10 [1] : vector<64x32xf32> to vector<64xf32>
    %19 = vector.shape_cast %18 : vector<64xf32> to vector<64x1xf32>
    %cst_11 = arith.constant 3.200000e+01 : f32
    %20 = vector.broadcast %cst_11 : f32 to vector<64x1xf32>
    %21 = arith.divf %19, %20 : vector<64x1xf32>
    %22 = arith.mulf %16, %16 : vector<64x1xf32>
    %23 = arith.subf %21, %22 : vector<64x1xf32>
    %cst_12 = arith.constant 0.000000e+00 : f32
    %24 = vector.broadcast %cst_12 : f32 to vector<64x1xf32>
    %25 = arith.maximumf %23, %24 : vector<64x1xf32>
    %26 = vector.broadcast %16 : vector<64x1xf32> to vector<64x32xf32>
    %27 = arith.subf %8, %26 : vector<64x32xf32>
    %cst_13 = arith.constant 9.99999974E-6 : f32
    %28 = vector.broadcast %cst_13 : f32 to vector<64x1xf32>
    %29 = arith.addf %25, %28 : vector<64x1xf32>
    %30 = math.rsqrt %29 : vector<64x1xf32>
    %31 = vector.broadcast %30 : vector<64x1xf32> to vector<64x32xf32>
    %32 = arith.mulf %27, %31 : vector<64x32xf32>
    %33 = vector.shape_cast %10 : vector<32xf32> to vector<1x32xf32>
    %34 = vector.broadcast %33 : vector<1x32xf32> to vector<64x32xf32>
    %35 = arith.mulf %32, %34 : vector<64x32xf32>
    %36 = vector.shape_cast %12 : vector<32xf32> to vector<1x32xf32>
    %37 = vector.broadcast %36 : vector<1x32xf32> to vector<64x32xf32>
    %38 = arith.addf %35, %37 : vector<64x32xf32>
    %cst_14 = arith.constant 0.000000e+00 : f32
    %39 = vector.broadcast %cst_14 : f32 to vector<64x32xf32>
    %40 = arith.maximumf %38, %39 : vector<64x32xf32>
    %c1_15 = arith.constant 1 : index
    %c0_16 = arith.constant 0 : index
    %c0_17 = arith.constant 0 : index
    %41 = vector.load %arg1[%c1_15, %c0_16, %c0_17] : memref<2x32x32xf32, #tpu.memory_space<vmem>>, vector<1x32x32xf32>
    %42 = vector.shape_cast %41 : vector<1x32x32xf32> to vector<32x32xf32>
    %cst_18 = arith.constant dense<0.000000e+00> : vector<64x32xf32>
    %43 = tpu.matmul %40, %42, %cst_18 {dimension_numbers = #tpu.dot_dimension_numbers<[1], [0], [0], [1], [0, 0, 1, 1], [], []>} : vector<64x32xf32>, vector<32x32xf32>, vector<64x32xf32> -> vector<64x32xf32>
    %c3 = arith.constant 3 : index
    %c0_19 = arith.constant 0 : index
    %44 = vector.load %arg2[%c3, %c0_19] : memref<8x32xf32, #tpu.memory_space<vmem>>, vector<1x32xf32>
    %45 = vector.shape_cast %44 : vector<1x32xf32> to vector<32xf32>
    %46 = vector.shape_cast %45 : vector<32xf32> to vector<1x32xf32>
    %47 = vector.broadcast %46 : vector<1x32xf32> to vector<64x32xf32>
    %48 = arith.addf %43, %47 : vector<64x32xf32>
    %c4 = arith.constant 4 : index
    %c0_20 = arith.constant 0 : index
    %49 = vector.load %arg2[%c4, %c0_20] : memref<8x32xf32, #tpu.memory_space<vmem>>, vector<1x32xf32>
    %50 = vector.shape_cast %49 : vector<1x32xf32> to vector<32xf32>
    %c5 = arith.constant 5 : index
    %c0_21 = arith.constant 0 : index
    %51 = vector.load %arg2[%c5, %c0_21] : memref<8x32xf32, #tpu.memory_space<vmem>>, vector<1x32xf32>
    %52 = vector.shape_cast %51 : vector<1x32xf32> to vector<32xf32>
    %cst_22 = arith.constant dense<0.000000e+00> : vector<64xf32>
    %53 = vector.multi_reduction <add>, %48, %cst_22 [1] : vector<64x32xf32> to vector<64xf32>
    %54 = vector.shape_cast %53 : vector<64xf32> to vector<64x1xf32>
    %cst_23 = arith.constant 3.200000e+01 : f32
    %55 = vector.broadcast %cst_23 : f32 to vector<64x1xf32>
    %56 = arith.divf %54, %55 : vector<64x1xf32>
    %57 = arith.mulf %48, %48 : vector<64x32xf32>
    %cst_24 = arith.constant dense<0.000000e+00> : vector<64xf32>
    %58 = vector.multi_reduction <add>, %57, %cst_24 [1] : vector<64x32xf32> to vector<64xf32>
    %59 = vector.shape_cast %58 : vector<64xf32> to vector<64x1xf32>
    %cst_25 = arith.constant 3.200000e+01 : f32
    %60 = vector.broadcast %cst_25 : f32 to vector<64x1xf32>
    %61 = arith.divf %59, %60 : vector<64x1xf32>
    %62 = arith.mulf %56, %56 : vector<64x1xf32>
    %63 = arith.subf %61, %62 : vector<64x1xf32>
    %cst_26 = arith.constant 0.000000e+00 : f32
    %64 = vector.broadcast %cst_26 : f32 to vector<64x1xf32>
    %65 = arith.maximumf %63, %64 : vector<64x1xf32>
    %66 = vector.broadcast %56 : vector<64x1xf32> to vector<64x32xf32>
    %67 = arith.subf %48, %66 : vector<64x32xf32>
    %cst_27 = arith.constant 9.99999974E-6 : f32
    %68 = vector.broadcast %cst_27 : f32 to vector<64x1xf32>
    %69 = arith.addf %65, %68 : vector<64x1xf32>
    %70 = math.rsqrt %69 : vector<64x1xf32>
    %71 = vector.broadcast %70 : vector<64x1xf32> to vector<64x32xf32>
    %72 = arith.mulf %67, %71 : vector<64x32xf32>
    %73 = vector.shape_cast %50 : vector<32xf32> to vector<1x32xf32>
    %74 = vector.broadcast %73 : vector<1x32xf32> to vector<64x32xf32>
    %75 = arith.mulf %72, %74 : vector<64x32xf32>
    %76 = vector.shape_cast %52 : vector<32xf32> to vector<1x32xf32>
    %77 = vector.broadcast %76 : vector<1x32xf32> to vector<64x32xf32>
    %78 = arith.addf %75, %77 : vector<64x32xf32>
    %cst_28 = arith.constant 0.000000e+00 : f32
    %79 = vector.broadcast %cst_28 : f32 to vector<64x32xf32>
    %80 = arith.maximumf %78, %79 : vector<64x32xf32>
    %c0_29 = arith.constant 0 : index
    %c0_30 = arith.constant 0 : index
    %c0_31 = arith.constant 0 : index
    %81 = vector.load %arg3[%c0_29, %c0_30, %c0_31] : memref<2x32x16xf32, #tpu.memory_space<vmem>>, vector<1x32x16xf32>
    %82 = vector.shape_cast %81 : vector<1x32x16xf32> to vector<32x16xf32>
    %cst_32 = arith.constant dense<0.000000e+00> : vector<64x16xf32>
    %83 = tpu.matmul %80, %82, %cst_32 {dimension_numbers = #tpu.dot_dimension_numbers<[1], [0], [0], [1], [0, 0, 1, 1], [], []>} : vector<64x32xf32>, vector<32x16xf32>, vector<64x16xf32> -> vector<64x16xf32>
    %c1_33 = arith.constant 1 : index
    %c0_34 = arith.constant 0 : index
    %c0_35 = arith.constant 0 : index
    %84 = vector.load %arg3[%c1_33, %c0_34, %c0_35] : memref<2x32x16xf32, #tpu.memory_space<vmem>>, vector<1x32x16xf32>
    %85 = vector.shape_cast %84 : vector<1x32x16xf32> to vector<32x16xf32>
    %cst_36 = arith.constant dense<0.000000e+00> : vector<64x16xf32>
    %86 = tpu.matmul %0, %85, %cst_36 {dimension_numbers = #tpu.dot_dimension_numbers<[1], [0], [0], [1], [0, 0, 1, 1], [], []>} : vector<64x32xf32>, vector<32x16xf32>, vector<64x16xf32> -> vector<64x16xf32>
    %87 = arith.addf %83, %86 : vector<64x16xf32>
    %c0_37 = arith.constant 0 : index
    %c0_38 = arith.constant 0 : index
    %88 = vector.load %arg4[%c0_37, %c0_38] : memref<1x16xf32, #tpu.memory_space<vmem>>, vector<1x16xf32>
    %89 = vector.broadcast %88 : vector<1x16xf32> to vector<64x16xf32>
    %90 = arith.addf %87, %89 : vector<64x16xf32>
    %c0_39 = arith.constant 0 : index
    %c0_40 = arith.constant 0 : index
    %91 = vector.load %arg5[%c0_39, %c0_40] : memref<64x16xf32, #tpu.memory_space<vmem>>, vector<64x16xf32>
    tpu.vector_store %arg5[%c0_39, %c0_40], %90 {strides = array<i32>} : memref<64x16xf32, #tpu.memory_space<vmem>>, vector<64x16xf32>,
    return
  }
}

</mosaic_0001>

<llo_original>
// kernel: tpu_custom_call.1
$region0: #{tpu_custom_call.1}
  #allocation0 [shape = 'u32[]', space=smem, size = 0x4, offset = 0x4, fixed_abs, tag = 'smem constant byte address 0x4 - core index']
  #allocation1 [shape = 'u32[144,128]{1,0:T(1,128)}', space=vmem, size = 0x12000, scoped, tag = 'internal scratch']
  %s0 = inlined_call_operand.vmem [shape: f32[64,32], index: 0, kind: input, shape index: {}]
  %s1 = inlined_call_operand.vmem [shape: f32[2,32,32], index: 1, kind: input, shape index: {}]
  %s2 = inlined_call_operand.vmem [shape: f32[8,32], index: 2, kind: input, shape index: {}]
  %s3 = inlined_call_operand.vmem [shape: f32[2,32,16], index: 3, kind: input, shape index: {}]
  %s4 = inlined_call_operand.vmem [shape: f32[1,16], index: 4, kind: input, shape index: {}]
  %s5 = inlined_call_operand.vmem [shape: f32[64,16], index: 5, kind: output, shape index: {}]
  %s6 = sld [smem:[#allocation0]]
  $region30: #{tpu_custom_call.1} parent=0
    _
  %s8 = ssub.s32 1, %s6
  %s9 = scalar_select 0, %s8, %s6
  // Predicated region
  $region2: #{tpu_custom_call.1} parent=0 // pred_check
    _
  $region3: #{tpu_custom_call.1} parent=0 // pred_check_branch
    %11 = sbr.rel (0) target = $region5
  $region4: #{tpu_custom_call.1} parent=0 // pred_region
    _
  $region5: #{tpu_custom_call.1} parent=0 // pred_fallthru
    _
  // Predicated region
  $region6: #{tpu_custom_call.1} parent=0 // pred_check
    _
  $region7: #{tpu_custom_call.1} parent=0 // pred_check_branch
    %13 = sbr.rel (0) target = $region9
  $region8: #{tpu_custom_call.1} parent=0 // pred_region
    _
  $region9: #{tpu_custom_call.1} parent=0 // pred_fallthru
    _
  // Predicated region
  $region10: #{tpu_custom_call.1} parent=0 // pred_check
    _
  $region11: #{tpu_custom_call.1} parent=0 // pred_check_branch
    %15 = sbr.rel (0) target = $region13
  $region12: #{tpu_custom_call.1} parent=0 // pred_region
    _
  $region13: #{tpu_custom_call.1} parent=0 // pred_fallthru
    _
  // Predicated region
  $region14: #{tpu_custom_call.1} parent=0 // pred_check
    _
  $region15: #{tpu_custom_call.1} parent=0 // pred_check_branch
    %17 = sbr.rel (0) target = $region17
  $region16: #{tpu_custom_call.1} parent=0 // pred_region
    _
  $region17: #{tpu_custom_call.1} parent=0 // pred_fallthru
    _
  // Predicated region
  $region18: #{tpu_custom_call.1} parent=0 // pred_check
    _
  $region19: #{tpu_custom_call.1} parent=0 // pred_check_branch
    %19 = sbr.rel (0) target = $region21
  $region20: #{tpu_custom_call.1} parent=0 // pred_region
    _
  $region21: #{tpu_custom_call.1} parent=0 // pred_fallthru
    _
  %v20 = vld [vmem:[%s0] sm:$0xff]
  %v21 = vld [vmem:[%s0 + $0x8] sm:$0xff]
  %v22 = vld [vmem:[%s0 + $0x10] sm:$0xff]
  %v23 = vld [vmem:[%s0 + $0x18] sm:$0xff]
  %v24 = vld [vmem:[%s0 + $0x20] sm:$0xff]
  %v25 = vld [vmem:[%s0 + $0x28] sm:$0xff]
  %v26 = vld [vmem:[%s0 + $0x30] sm:$0xff]
  %v27 = vld [vmem:[%s0 + $0x38] sm:$0xff]
  %v28 = vld [vmem:[%s1] sm:$0xff]
  %v29 = vld [vmem:[%s1 + $0x8] sm:$0xff]
  %v30 = vld [vmem:[%s1 + $0x10] sm:$0xff]
  %v31 = vld [vmem:[%s1 + $0x18] sm:$0xff]
  %v32 = vld [vmem:[%s2] sm:$0x1]
  %v33 = vlaneseq
  %v34 = vshrl.u32 %v33, 7
  %v35 = vsub.s32 0, %v34
  %v36 = vrot.slane %v32, %v35
  %vm37 = vcmask 261120
  %v39 = vsel %vm37, %v20, 0
  %v42 = vsel %vm37, %v21, 0
  %v45 = vsel %vm37, %v22, 0
  %v48 = vsel %vm37, %v23, 0
  %v51 = vsel %vm37, %v24, 0
  %v54 = vsel %vm37, %v25, 0
  %v57 = vsel %vm37, %v26, 0
  %v60 = vsel %vm37, %v27, 0
  %62 = vmatprep.subr.mxu0 0.0
  %63 = vmatpush1.msra.mxu0 0.0
  %64 = vmatprep.subr.mxu0 0.0
  %65 = vmatpush1.msra.mxu0 0.0
  %66 = vmatprep.subr.mxu0 0.0
  %67 = vmatpush1.msra.mxu0 0.0
  %68 = vmatprep.subr.mxu0 0.0
  %69 = vmatpush1.msra.mxu0 0.0
  %70 = vmatprep.subr.mxu0 0.0
  %71 = vmatpush1.msra.mxu0 0.0
  %72 = vmatprep.subr.mxu0 0.0
  %73 = vmatpush1.msra.mxu0 0.0
  %74 = vmatprep.subr.mxu0 0.0
  %75 = vmatpush1.msra.mxu0 0.0
  %76 = vmatprep.subr.mxu0 0.0
  %77 = vmatpush1.msra.mxu0 0.0
  %78 = vmatprep.subr.mxu0 0.0
  %79 = vmatpush1.msra.mxu0 0.0
  %80 = vmatprep.subr.mxu0 0.0
  %81 = vmatpush1.msra.mxu0 0.0
  %82 = vmatprep.subr.mxu0 0.0
  %83 = vmatpush1.msra.mxu0 0.0
  %84 = vmatprep.subr.mxu0 0.0
  %85 = vmatpush1.msra.mxu0 0.0
  %86 = vmatprep.subr.mxu0 0.0
  %87 = vmatpush1.msra.mxu0 %v31
  %88 = vmatprep.subr.mxu0 0.0
  %89 = vmatpush1.msra.mxu0 %v30
  %90 = vmatprep.subr.mxu0 0.0
  %91 = vmatpush1.msra.mxu0 %v29
  %92 = vmatprep.subr.mxu0 0.0
  %93 = vmatpush1.msra.mxu0 %v28
  %94 = vmatprep.subr.mxu0 0.0
  %95 = vmatpush2.msra.mxu0 0.0
  %96 = vmatprep.subr.mxu0 0.0
  %97 = vmatpush2.msra.mxu0 0.0
  %98 = vmatprep.subr.mxu0 0.0
  %99 = vmatpush2.msra.mxu0 0.0
  %100 = vmatprep.subr.mxu0 0.0
  %101 = vmatpush2.msra.mxu0 0.0
  %102 = vmatprep.subr.mxu0 0.0
  %103 = vmatpush2.msra.mxu0 0.0
  %104 = vmatprep.subr.mxu0 0.0
  %105 = vmatpush2.msra.mxu0 0.0
  %106 = vmatprep.subr.mxu0 0.0
  %107 = vmatpush2.msra.mxu0 0.0
  %108 = vmatprep.subr.mxu0 0.0
  %109 = vmatpush2.msra.mxu0 0.0
  %110 = vmatprep.subr.mxu0 0.0
  %111 = vmatpush2.msra.mxu0 0.0
  %112 = vmatprep.subr.mxu0 0.0
  %113 = vmatpush2.msra.mxu0 0.0
  %114 = vmatprep.subr.mxu0 0.0
  %115 = vmatpush2.msra.mxu0 0.0
  %116 = vmatprep.subr.mxu0 0.0
  %117 = vmatpush2.msra.mxu0 0.0
  %118 = vmatprep.subr.mxu0 0.0
  %119 = vmatpush2.msra.mxu0 0.0
  %120 = vmatprep.subr.mxu0 0.0
  %121 = vmatpush2.msra.mxu0 0.0
  %122 = vmatprep.subr.mxu0 0.0
  %123 = vmatpush2.msra.mxu0 0.0
  %124 = vmatprep.subr.mxu0 0.0
  %125 = vmatpush2.msra.mxu0 0.0
  %126 = vmatprep.mubr.f32.mxu0 0.0
  %127 = vmatmul.mubr.f32.gmra.mxu0 %v39
  %v128 = vpop.f32.mrf.mxu0
  %v129 = vadd.f32 %v36, %v128
  %v130 = vpop.f32.mrf.mxu0
  %131 = vmatprep.mubr.f32.mxu0 0.0
  %132 = vmatmul.mubr.f32.gmra.mxu0 %v42
  %v133 = vpop.f32.mrf.mxu0
  %v134 = vadd.f32 %v36, %v133
  %v135 = vpop.f32.mrf.mxu0
  %136 = vmatprep.mubr.f32.mxu0 0.0
  %137 = vmatmul.mubr.f32.gmra.mxu0 %v45
  %v138 = vpop.f32.mrf.mxu0
  %v139 = vadd.f32 %v36, %v138
  %v140 = vpop.f32.mrf.mxu0
  %141 = vmatprep.mubr.f32.mxu0 0.0
  %142 = vmatmul.mubr.f32.gmra.mxu0 %v48
  %v143 = vpop.f32.mrf.mxu0
  %v144 = vadd.f32 %v36, %v143
  %v145 = vpop.f32.mrf.mxu0
  %146 = vmatprep.mubr.f32.mxu0 0.0
  %147 = vmatmul.mubr.f32.gmra.mxu0 %v51
  %v148 = vpop.f32.mrf.mxu0
  %v149 = vadd.f32 %v36, %v148
  %v150 = vpop.f32.mrf.mxu0
  %151 = vmatprep.mubr.f32.mxu0 0.0
  %152 = vmatmul.mubr.f32.gmra.mxu0 %v54
  %v153 = vpop.f32.mrf.mxu0
  %v154 = vadd.f32 %v36, %v153
  %v155 = vpop.f32.mrf.mxu0
  %156 = vmatprep.mubr.f32.mxu0 0.0
  %157 = vmatmul.mubr.f32.gmra.mxu0 %v57
  %v158 = vpop.f32.mrf.mxu0
  %v159 = vadd.f32 %v36, %v158
  %v160 = vpop.f32.mrf.mxu0
  %161 = vmatprep.mubr.f32.mxu0 0.0
  %162 = vmatmul.mubr.f32.gmra.mxu0 %v60
  %v163 = vpop.f32.mrf.mxu0
  %v164 = vadd.f32 %v36, %v163
  %v165 = vpop.f32.mrf.mxu0
  %166 = vdwg.mxu0
  %v167 = vld [vmem:[%s2 + $0x1] sm:$0x1]
  %v168 = vld [vmem:[%s2 + $0x2] sm:$0x1]
  %v169 = vsel %vm37, %v129, 0.0
  %170 = vadd.xlane.f32.xlu0 %v169
  %v171 = vpop.xlane.xlu0 %170
  %v172 = vsel %vm37, %v134, 0.0
  %173 = vadd.xlane.f32.xlu0 %v172
  %v174 = vpop.xlane.xlu0 %173
  %v175 = vsel %vm37, %v139, 0.0
  %176 = vadd.xlane.f32.xlu0 %v175
  %v177 = vpop.xlane.xlu0 %176
  %v178 = vsel %vm37, %v144, 0.0
  %179 = vadd.xlane.f32.xlu0 %v178
  %v180 = vpop.xlane.xlu0 %179
  %v181 = vsel %vm37, %v149, 0.0
  %182 = vadd.xlane.f32.xlu0 %v181
  %v183 = vpop.xlane.xlu0 %182
  %v184 = vsel %vm37, %v154, 0.0
  %185 = vadd.xlane.f32.xlu0 %v184
  %v186 = vpop.xlane.xlu0 %185
  %v187 = vsel %vm37, %v159, 0.0
  %188 = vadd.xlane.f32.xlu0 %v187
  %v189 = vpop.xlane.xlu0 %188
  %v190 = vsel %vm37, %v164, 0.0
  %191 = vadd.xlane.f32.xlu0 %v190
  %v192 = vpop.xlane.xlu0 %191
  %v193 = vrcp.pop 32.0
  %v194 = vmul.f32 %v171, %v193
  %v195 = vmul.f32 %v174, %v193
  %v196 = vmul.f32 %v177, %v193
  %v197 = vmul.f32 %v180, %v193
  %v198 = vmul.f32 %v183, %v193
  %v199 = vmul.f32 %v186, %v193
  %v200 = vmul.f32 %v189, %v193
  %v201 = vmul.f32 %v192, %v193
  %v202 = vmul.f32 %v129, %v129
  %v203 = vmul.f32 %v134, %v134
  %v204 = vmul.f32 %v139, %v139
  %v205 = vmul.f32 %v144, %v144
  %v206 = vmul.f32 %v149, %v149
  %v207 = vmul.f32 %v154, %v154
  %v208 = vmul.f32 %v159, %v159
  %v209 = vmul.f32 %v164, %v164
  %v210 = vsel %vm37, %v202, 0.0
  %211 = vadd.xlane.f32.xlu0 %v210
  %v212 = vpop.xlane.xlu0 %211
  %v213 = vsel %vm37, %v203, 0.0
  %214 = vadd.xlane.f32.xlu0 %v213
  %v215 = vpop.xlane.xlu0 %214
  %v216 = vsel %vm37, %v204, 0.0
  %217 = vadd.xlane.f32.xlu0 %v216
  %v218 = vpop.xlane.xlu0 %217
  %v219 = vsel %vm37, %v205, 0.0
  %220 = vadd.xlane.f32.xlu0 %v219
  %v221 = vpop.xlane.xlu0 %220
  %v222 = vsel %vm37, %v206, 0.0
  %223 = vadd.xlane.f32.xlu0 %v222
  %v224 = vpop.xlane.xlu0 %223
  %v225 = vsel %vm37, %v207, 0.0
  %226 = vadd.xlane.f32.xlu0 %v225
  %v227 = vpop.xlane.xlu0 %226
  %v228 = vsel %vm37, %v208, 0.0
  %229 = vadd.xlane.f32.xlu0 %v228
  %v230 = vpop.xlane.xlu0 %229
  %v231 = vsel %vm37, %v209, 0.0
  %232 = vadd.xlane.f32.xlu0 %v231
  %v233 = vpop.xlane.xlu0 %232
  %v234 = vmul.f32 %v212, %v193
  %v235 = vmul.f32 %v215, %v193
  %v236 = vmul.f32 %v218, %v193
  %v237 = vmul.f32 %v221, %v193
  %v238 = vmul.f32 %v224, %v193
  %v239 = vmul.f32 %v227, %v193
  %v240 = vmul.f32 %v230, %v193
  %v241 = vmul.f32 %v233, %v193
  %v242 = vmul.f32 %v194, %v194
  %v243 = vmul.f32 %v195, %v195
  %v244 = vmul.f32 %v196, %v196
  %v245 = vmul.f32 %v197, %v197
  %v246 = vmul.f32 %v198, %v198
  %v247 = vmul.f32 %v199, %v199
  %v248 = vmul.f32 %v200, %v200
  %v249 = vmul.f32 %v201, %v201
  %v250 = vsub.f32 %v234, %v242
  %v251 = vsub.f32 %v235, %v243
  %v252 = vsub.f32 %v236, %v244
  %v253 = vsub.f32 %v237, %v245
  %v254 = vsub.f32 %v238, %v246
  %v255 = vsub.f32 %v239, %v247
  %v256 = vsub.f32 %v240, %v248
  %v257 = vsub.f32 %v241, %v249
  %v258 = vmax.f32 %v250, 0.0
  %v259 = vmax.f32 %v251, 0.0
  %v260 = vmax.f32 %v252, 0.0
  %v261 = vmax.f32 %v253, 0.0
  %v262 = vmax.f32 %v254, 0.0
  %v263 = vmax.f32 %v255, 0.0
  %v264 = vmax.f32 %v256, 0.0
  %v265 = vmax.f32 %v257, 0.0
  %v266 = vsub.f32 %v129, %v194
  %v267 = vsub.f32 %v134, %v195
  %v268 = vsub.f32 %v139, %v196
  %v269 = vsub.f32 %v144, %v197
  %v270 = vsub.f32 %v149, %v198
  %v271 = vsub.f32 %v154, %v199
  %v272 = vsub.f32 %v159, %v200
  %v273 = vsub.f32 %v164, %v201
  %v274 = vadd.f32 %v258, 1e-05
  %v275 = vadd.f32 %v259, 1e-05
  %v276 = vadd.f32 %v260, 1e-05
  %v277 = vadd.f32 %v261, 1e-05
  %v278 = vadd.f32 %v262, 1e-05
  %v279 = vadd.f32 %v263, 1e-05
  %v280 = vadd.f32 %v264, 1e-05
  %v281 = vadd.f32 %v265, 1e-05
  %v282 = vrsqrt.pop %v274
  %v283 = vrsqrt.pop %v275
  %v284 = vrsqrt.pop %v276
  %v285 = vrsqrt.pop %v277
  %v286 = vrsqrt.pop %v278
  %v287 = vrsqrt.pop %v279
  %v288 = vrsqrt.pop %v280
  %v289 = vrsqrt.pop %v281
  %v290 = vmul.f32 %v266, %v282
  %v291 = vmul.f32 %v267, %v283
  %v292 = vmul.f32 %v268, %v284
  %v293 = vmul.f32 %v269, %v285
  %v294 = vmul.f32 %v270, %v286
  %v295 = vmul.f32 %v271, %v287
  %v296 = vmul.f32 %v272, %v288
  %v297 = vmul.f32 %v273, %v289
  %v298 = vlaneseq
  %v299 = vshrl.u32 %v298, 7
  %v300 = vsub.s32 0, %v299
  %v301 = vrot.slane %v167, %v300
  %v302 = vmul.f32 %v290, %v301
  %v303 = vmul.f32 %v291, %v301
  %v304 = vmul.f32 %v292, %v301
  %v305 = vmul.f32 %v293, %v301
  %v306 = vmul.f32 %v294, %v301
  %v307 = vmul.f32 %v295, %v301
  %v308 = vmul.f32 %v296, %v301
  %v309 = vmul.f32 %v297, %v301
  %v310 = vlaneseq
  %v311 = vshrl.u32 %v310, 7
  %v312 = vsub.s32 0, %v311
  %v313 = vrot.slane %v168, %v312
  %v314 = vadd.f32 %v302, %v313
  %v315 = vadd.f32 %v303, %v313
  %v316 = vadd.f32 %v304, %v313
  %v317 = vadd.f32 %v305, %v313
  %v318 = vadd.f32 %v306, %v313
  %v319 = vadd.f32 %v307, %v313
  %v320 = vadd.f32 %v308, %v313
  %v321 = vadd.f32 %v309, %v313
  %v322 = vmax.f32 %v314, 0.0
  %v323 = vmax.f32 %v315, 0.0
  %v324 = vmax.f32 %v316, 0.0
  %v325 = vmax.f32 %v317, 0.0
  %v326 = vmax.f32 %v318, 0.0
  %v327 = vmax.f32 %v319, 0.0
  %v328 = vmax.f32 %v320, 0.0
  %v329 = vmax.f32 %v321, 0.0
  %s330 = scalar_lea.vmem %s1, 32
  %v331 = vld [vmem:[%s330] sm:$0xff]
  %v332 = vld [vmem:[%s330 + $0x8] sm:$0xff]
  %v333 = vld [vmem:[%s330 + $0x10] sm:$0xff]
  %v334 = vld [vmem:[%s330 + $0x18] sm:$0xff]
  %v335 = vld [vmem:[%s2 + $0x3] sm:$0x1]
  %v336 = vlaneseq
  %v337 = vshrl.u32 %v336, 7
  %v338 = vsub.s32 0, %v337
  %v339 = vrot.slane %v335, %v338
  %v341 = vsel %vm37, %v322, 0
  %v344 = vsel %vm37, %v323, 0
  %v347 = vsel %vm37, %v324, 0
  %v350 = vsel %vm37, %v325, 0
  %v353 = vsel %vm37, %v326, 0
  %v356 = vsel %vm37, %v327, 0
  %v359 = vsel %vm37, %v328, 0
  %v362 = vsel %vm37, %v329, 0
  %364 = vmatprep.subr.mxu0 0.0
  %365 = vmatpush1.msra.mxu0 0.0
  %366 = vmatprep.subr.mxu0 0.0
  %367 = vmatpush1.msra.mxu0 0.0
  %368 = vmatprep.subr.mxu0 0.0
  %369 = vmatpush1.msra.mxu0 0.0
  %370 = vmatprep.subr.mxu0 0.0
  %371 = vmatpush1.msra.mxu0 0.0
  %372 = vmatprep.subr.mxu0 0.0
  %373 = vmatpush1.msra.mxu0 0.0
  %374 = vmatprep.subr.mxu0 0.0
  %375 = vmatpush1.msra.mxu0 0.0
  %376 = vmatprep.subr.mxu0 0.0
  %377 = vmatpush1.msra.mxu0 0.0
  %378 = vmatprep.subr.mxu0 0.0
  %379 = vmatpush1.msra.mxu0 0.0
  %380 = vmatprep.subr.mxu0 0.0
  %381 = vmatpush1.msra.mxu0 0.0
  %382 = vmatprep.subr.mxu0 0.0
  %383 = vmatpush1.msra.mxu0 0.0
  %384 = vmatprep.subr.mxu0 0.0
  %385 = vmatpush1.msra.mxu0 0.0
  %386 = vmatprep.subr.mxu0 0.0
  %387 = vmatpush1.msra.mxu0 0.0
  %388 = vmatprep.subr.mxu0 0.0
  %389 = vmatpush1.msra.mxu0 %v334
  %390 = vmatprep.subr.mxu0 0.0
  %391 = vmatpush1.msra.mxu0 %v333
  %392 = vmatprep.subr.mxu0 0.0
  %393 = vmatpush1.msra.mxu0 %v332
  %394 = vmatprep.subr.mxu0 0.0
  %395 = vmatpush1.msra.mxu0 %v331
  %396 = vmatprep.subr.mxu0 0.0
  %397 = vmatpush2.msra.mxu0 0.0
  %398 = vmatprep.subr.mxu0 0.0
  %399 = vmatpush2.msra.mxu0 0.0
  %400 = vmatprep.subr.mxu0 0.0
  %401 = vmatpush2.msra.mxu0 0.0
  %402 = vmatprep.subr.mxu0 0.0
  %403 = vmatpush2.msra.mxu0 0.0
  %404 = vmatprep.subr.mxu0 0.0
  %405 = vmatpush2.msra.mxu0 0.0
  %406 = vmatprep.subr.mxu0 0.0
  %407 = vmatpush2.msra.mxu0 0.0
  %408 = vmatprep.subr.mxu0 0.0
  %409 = vmatpush2.msra.mxu0 0.0
  %410 = vmatprep.subr.mxu0 0.0
  %411 = vmatpush2.msra.mxu0 0.0
  %412 = vmatprep.subr.mxu0 0.0
  %413 = vmatpush2.msra.mxu0 0.0
  %414 = vmatprep.subr.mxu0 0.0
  %415 = vmatpush2.msra.mxu0 0.0
  %416 = vmatprep.subr.mxu0 0.0
  %417 = vmatpush2.msra.mxu0 0.0
  %418 = vmatprep.subr.mxu0 0.0
  %419 = vmatpush2.msra.mxu0 0.0
  %420 = vmatprep.subr.mxu0 0.0
  %421 = vmatpush2.msra.mxu0 0.0
  %422 = vmatprep.subr.mxu0 0.0
  %423 = vmatpush2.msra.mxu0 0.0
  %424 = vmatprep.subr.mxu0 0.0
  %425 = vmatpush2.msra.mxu0 0.0
  %426 = vmatprep.subr.mxu0 0.0
  %427 = vmatpush2.msra.mxu0 0.0
  %428 = vmatprep.mubr.f32.mxu0 0.0
  %429 = vmatmul.mubr.f32.gmra.mxu0 %v341
  %v430 = vpop.f32.mrf.mxu0
  %v431 = vadd.f32 %v339, %v430
  %v432 = vpop.f32.mrf.mxu0
  %433 = vmatprep.mubr.f32.mxu0 0.0
  %434 = vmatmul.mubr.f32.gmra.mxu0 %v344
  %v435 = vpop.f32.mrf.mxu0
  %v436 = vadd.f32 %v339, %v435
  %v437 = vpop.f32.mrf.mxu0
  %438 = vmatprep.mubr.f32.mxu0 0.0
  %439 = vmatmul.mubr.f32.gmra.mxu0 %v347
  %v440 = vpop.f32.mrf.mxu0
  %v441 = vadd.f32 %v339, %v440
  %v442 = vpop.f32.mrf.mxu0
  %443 = vmatprep.mubr.f32.mxu0 0.0
  %444 = vmatmul.mubr.f32.gmra.mxu0 %v350
  %v445 = vpop.f32.mrf.mxu0
  %v446 = vadd.f32 %v339, %v445
  %v447 = vpop.f32.mrf.mxu0
  %448 = vmatprep.mubr.f32.mxu0 0.0
  %449 = vmatmul.mubr.f32.gmra.mxu0 %v353
  %v450 = vpop.f32.mrf.mxu0
  %v451 = vadd.f32 %v339, %v450
  %v452 = vpop.f32.mrf.mxu0
  %453 = vmatprep.mubr.f32.mxu0 0.0
  %454 = vmatmul.mubr.f32.gmra.mxu0 %v356
  %v455 = vpop.f32.mrf.mxu0
  %v456 = vadd.f32 %v339, %v455
  %v457 = vpop.f32.mrf.mxu0
  %458 = vmatprep.mubr.f32.mxu0 0.0
  %459 = vmatmul.mubr.f32.gmra.mxu0 %v359
  %v460 = vpop.f32.mrf.mxu0
  %v461 = vadd.f32 %v339, %v460
  %v462 = vpop.f32.mrf.mxu0
  %463 = vmatprep.mubr.f32.mxu0 0.0
  %464 = vmatmul.mubr.f32.gmra.mxu0 %v362
  %v465 = vpop.f32.mrf.mxu0
  %v466 = vadd.f32 %v339, %v465
  %v467 = vpop.f32.mrf.mxu0
  %468 = vdwg.mxu0
  %v469 = vld [vmem:[%s2 + $0x4] sm:$0x1]
  %v470 = vld [vmem:[%s2 + $0x5] sm:$0x1]
  %v471 = vsel %vm37, %v431, 0.0
  %472 = vadd.xlane.f32.xlu0 %v471
  %v473 = vpop.xlane.xlu0 %472
  %v474 = vsel %vm37, %v436, 0.0
  %475 = vadd.xlane.f32.xlu0 %v474
  %v476 = vpop.xlane.xlu0 %475
  %v477 = vsel %vm37, %v441, 0.0
  %478 = vadd.xlane.f32.xlu0 %v477
  %v479 = vpop.xlane.xlu0 %478
  %v480 = vsel %vm37, %v446, 0.0
  %481 = vadd.xlane.f32.xlu0 %v480
  %v482 = vpop.xlane.xlu0 %481
  %v483 = vsel %vm37, %v451, 0.0
  %484 = vadd.xlane.f32.xlu0 %v483
  %v485 = vpop.xlane.xlu0 %484
  %v486 = vsel %vm37, %v456, 0.0
  %487 = vadd.xlane.f32.xlu0 %v486
  %v488 = vpop.xlane.xlu0 %487
  %v489 = vsel %vm37, %v461, 0.0
  %490 = vadd.xlane.f32.xlu0 %v489
  %v491 = vpop.xlane.xlu0 %490
  %v492 = vsel %vm37, %v466, 0.0
  %493 = vadd.xlane.f32.xlu0 %v492
  %v494 = vpop.xlane.xlu0 %493
  %v495 = vmul.f32 %v473, %v193
  %v496 = vmul.f32 %v476, %v193
  %v497 = vmul.f32 %v479, %v193
  %v498 = vmul.f32 %v482, %v193
  %v499 = vmul.f32 %v485, %v193
  %v500 = vmul.f32 %v488, %v193
  %v501 = vmul.f32 %v491, %v193
  %v502 = vmul.f32 %v494, %v193
  %v503 = vmul.f32 %v431, %v431
  %v504 = vmul.f32 %v436, %v436
  %v505 = vmul.f32 %v441, %v441
  %v506 = vmul.f32 %v446, %v446
  %v507 = vmul.f32 %v451, %v451
  %v508 = vmul.f32 %v456, %v456
  %v509 = vmul.f32 %v461, %v461
  %v510 = vmul.f32 %v466, %v466
  %v511 = vsel %vm37, %v503, 0.0
  %512 = vadd.xlane.f32.xlu0 %v511
  %v513 = vpop.xlane.xlu0 %512
  %v514 = vsel %vm37, %v504, 0.0
  %515 = vadd.xlane.f32.xlu0 %v514
  %v516 = vpop.xlane.xlu0 %515
  %v517 = vsel %vm37, %v505, 0.0
  %518 = vadd.xlane.f32.xlu0 %v517
  %v519 = vpop.xlane.xlu0 %518
  %v520 = vsel %vm37, %v506, 0.0
  %521 = vadd.xlane.f32.xlu0 %v520
  %v522 = vpop.xlane.xlu0 %521
  %v523 = vsel %vm37, %v507, 0.0
  %524 = vadd.xlane.f32.xlu0 %v523
  %v525 = vpop.xlane.xlu0 %524
  %v526 = vsel %vm37, %v508, 0.0
  %527 = vadd.xlane.f32.xlu0 %v526
  %v528 = vpop.xlane.xlu0 %527
  %v529 = vsel %vm37, %v509, 0.0
  %530 = vadd.xlane.f32.xlu0 %v529
  %v531 = vpop.xlane.xlu0 %530
  %v532 = vsel %vm37, %v510, 0.0
  %533 = vadd.xlane.f32.xlu0 %v532
  %v534 = vpop.xlane.xlu0 %533
  %v535 = vmul.f32 %v513, %v193
  %v536 = vmul.f32 %v516, %v193
  %v537 = vmul.f32 %v519, %v193
  %v538 = vmul.f32 %v522, %v193
  %v539 = vmul.f32 %v525, %v193
  %v540 = vmul.f32 %v528, %v193
  %v541 = vmul.f32 %v531, %v193
  %v542 = vmul.f32 %v534, %v193
  %v543 = vmul.f32 %v495, %v495
  %v544 = vmul.f32 %v496, %v496
  %v545 = vmul.f32 %v497, %v497
  %v546 = vmul.f32 %v498, %v498
  %v547 = vmul.f32 %v499, %v499
  %v548 = vmul.f32 %v500, %v500
  %v549 = vmul.f32 %v501, %v501
  %v550 = vmul.f32 %v502, %v502
  %v551 = vsub.f32 %v535, %v543
  %v552 = vsub.f32 %v536, %v544
  %v553 = vsub.f32 %v537, %v545
  %v554 = vsub.f32 %v538, %v546
  %v555 = vsub.f32 %v539, %v547
  %v556 = vsub.f32 %v540, %v548
  %v557 = vsub.f32 %v541, %v549
  %v558 = vsub.f32 %v542, %v550
  %v559 = vmax.f32 %v551, 0.0
  %v560 = vmax.f32 %v552, 0.0
  %v561 = vmax.f32 %v553, 0.0
  %v562 = vmax.f32 %v554, 0.0
  %v563 = vmax.f32 %v555, 0.0
  %v564 = vmax.f32 %v556, 0.0
  %v565 = vmax.f32 %v557, 0.0
  %v566 = vmax.f32 %v558, 0.0
  %v567 = vsub.f32 %v431, %v495
  %v568 = vsub.f32 %v436, %v496
  %v569 = vsub.f32 %v441, %v497
  %v570 = vsub.f32 %v446, %v498
  %v571 = vsub.f32 %v451, %v499
  %v572 = vsub.f32 %v456, %v500
  %v573 = vsub.f32 %v461, %v501
  %v574 = vsub.f32 %v466, %v502
  %v575 = vadd.f32 %v559, 1e-05
  %v576 = vadd.f32 %v560, 1e-05
  %v577 = vadd.f32 %v561, 1e-05
  %v578 = vadd.f32 %v562, 1e-05
  %v579 = vadd.f32 %v563, 1e-05
  %v580 = vadd.f32 %v564, 1e-05
  %v581 = vadd.f32 %v565, 1e-05
  %v582 = vadd.f32 %v566, 1e-05
  %v583 = vrsqrt.pop %v575
  %v584 = vrsqrt.pop %v576
  %v585 = vrsqrt.pop %v577
  %v586 = vrsqrt.pop %v578
  %v587 = vrsqrt.pop %v579
  %v588 = vrsqrt.pop %v580
  %v589 = vrsqrt.pop %v581
  %v590 = vrsqrt.pop %v582
  %v591 = vmul.f32 %v567, %v583
  %v592 = vmul.f32 %v568, %v584
  %v593 = vmul.f32 %v569, %v585
  %v594 = vmul.f32 %v570, %v586
  %v595 = vmul.f32 %v571, %v587
  %v596 = vmul.f32 %v572, %v588
  %v597 = vmul.f32 %v573, %v589
  %v598 = vmul.f32 %v574, %v590
  %v599 = vlaneseq
  %v600 = vshrl.u32 %v599, 7
  %v601 = vsub.s32 0, %v600
  %v602 = vrot.slane %v469, %v601
  %v603 = vmul.f32 %v591, %v602
  %v604 = vmul.f32 %v592, %v602
  %v605 = vmul.f32 %v593, %v602
  %v606 = vmul.f32 %v594, %v602
  %v607 = vmul.f32 %v595, %v602
  %v608 = vmul.f32 %v596, %v602
  %v609 = vmul.f32 %v597, %v602
  %v610 = vmul.f32 %v598, %v602
  %v611 = vlaneseq
  %v612 = vshrl.u32 %v611, 7
  %v613 = vsub.s32 0, %v612
  %v614 = vrot.slane %v470, %v613
  %v615 = vadd.f32 %v603, %v614
  %v616 = vadd.f32 %v604, %v614
  %v617 = vadd.f32 %v605, %v614
  %v618 = vadd.f32 %v606, %v614
  %v619 = vadd.f32 %v607, %v614
  %v620 = vadd.f32 %v608, %v614
  %v621 = vadd.f32 %v609, %v614
  %v622 = vadd.f32 %v610, %v614
  %v623 = vmax.f32 %v615, 0.0
  %v624 = vmax.f32 %v616, 0.0
  %v625 = vmax.f32 %v617, 0.0
  %v626 = vmax.f32 %v618, 0.0
  %v627 = vmax.f32 %v619, 0.0
  %v628 = vmax.f32 %v620, 0.0
  %v629 = vmax.f32 %v621, 0.0
  %v630 = vmax.f32 %v622, 0.0
  %v631 = vld [vmem:[%s3] sm:$0xff]
  %v632 = vld [vmem:[%s3 + $0x8] sm:$0xff]
  %v633 = vld [vmem:[%s3 + $0x10] sm:$0xff]
  %v634 = vld [vmem:[%s3 + $0x18] sm:$0xff]
  %s635 = scalar_lea.vmem %s3, 32
  %v636 = vld [vmem:[%s635] sm:$0xff]
  %v637 = vld [vmem:[%s635 + $0x8] sm:$0xff]
  %v638 = vld [vmem:[%s635 + $0x10] sm:$0xff]
  %v639 = vld [vmem:[%s635 + $0x18] sm:$0xff]
  %640 = vmatprep.subr.mxu0 0.0
  %641 = vmatpush1.msra.mxu0 0.0
  %642 = vmatprep.subr.mxu0 0.0
  %643 = vmatpush1.msra.mxu0 0.0
  %644 = vmatprep.subr.mxu0 0.0
  %645 = vmatpush1.msra.mxu0 0.0
  %646 = vmatprep.subr.mxu0 0.0
  %647 = vmatpush1.msra.mxu0 0.0
  %648 = vmatprep.subr.mxu0 0.0
  %649 = vmatpush1.msra.mxu0 0.0
  %650 = vmatprep.subr.mxu0 0.0
  %651 = vmatpush1.msra.mxu0 0.0
  %652 = vmatprep.subr.mxu0 0.0
  %653 = vmatpush1.msra.mxu0 0.0
  %654 = vmatprep.subr.mxu0 0.0
  %655 = vmatpush1.msra.mxu0 0.0
  %656 = vmatprep.subr.mxu0 0.0
  %657 = vmatpush1.msra.mxu0 0.0
  %658 = vmatprep.subr.mxu0 0.0
  %659 = vmatpush1.msra.mxu0 0.0
  %660 = vmatprep.subr.mxu0 0.0
  %661 = vmatpush1.msra.mxu0 0.0
  %662 = vmatprep.subr.mxu0 0.0
  %663 = vmatpush1.msra.mxu0 0.0
  %664 = vmatprep.subr.mxu0 0.0
  %665 = vmatpush1.msra.mxu0 %v639
  %666 = vmatprep.subr.mxu0 0.0
  %667 = vmatpush1.msra.mxu0 %v638
  %668 = vmatprep.subr.mxu0 0.0
  %669 = vmatpush1.msra.mxu0 %v637
  %670 = vmatprep.subr.mxu0 0.0
  %671 = vmatpush1.msra.mxu0 %v636
  %672 = vmatprep.subr.mxu0 0.0
  %673 = vmatpush2.msra.mxu0 0.0
  %674 = vmatprep.subr.mxu0 0.0
  %675 = vmatpush2.msra.mxu0 0.0
  %676 = vmatprep.subr.mxu0 0.0
  %677 = vmatpush2.msra.mxu0 0.0
  %678 = vmatprep.subr.mxu0 0.0
  %679 = vmatpush2.msra.mxu0 0.0
  %680 = vmatprep.subr.mxu0 0.0
  %681 = vmatpush2.msra.mxu0 0.0
  %682 = vmatprep.subr.mxu0 0.0
  %683 = vmatpush2.msra.mxu0 0.0
  %684 = vmatprep.subr.mxu0 0.0
  %685 = vmatpush2.msra.mxu0 0.0
  %686 = vmatprep.subr.mxu0 0.0
  %687 = vmatpush2.msra.mxu0 0.0
  %688 = vmatprep.subr.mxu0 0.0
  %689 = vmatpush2.msra.mxu0 0.0
  %690 = vmatprep.subr.mxu0 0.0
  %691 = vmatpush2.msra.mxu0 0.0
  %692 = vmatprep.subr.mxu0 0.0
  %693 = vmatpush2.msra.mxu0 0.0
  %694 = vmatprep.subr.mxu0 0.0
  %695 = vmatpush2.msra.mxu0 0.0
  %696 = vmatprep.subr.mxu0 0.0
  %697 = vmatpush2.msra.mxu0 0.0
  %698 = vmatprep.subr.mxu0 0.0
  %699 = vmatpush2.msra.mxu0 0.0
  %700 = vmatprep.subr.mxu0 0.0
  %701 = vmatpush2.msra.mxu0 0.0
  %702 = vmatprep.subr.mxu0 0.0
  %703 = vmatpush2.msra.mxu0 0.0
  %704 = vmatprep.mubr.f32.mxu0 0.0
  %705 = vmatmul.mubr.f32.gmra.mxu0 %v39
  %v706 = vpop.f32.mrf.mxu0
  %v707 = vadd.f32 0.0, %v706
  %v708 = vpop.f32.mrf.mxu0
  %709 = vmatprep.mubr.f32.mxu0 0.0
  %710 = vmatmul.mubr.f32.gmra.mxu0 %v42
  %v711 = vpop.f32.mrf.mxu0
  %v712 = vadd.f32 0.0, %v711
  %v713 = vpop.f32.mrf.mxu0
  %714 = vmatprep.mubr.f32.mxu0 0.0
  %715 = vmatmul.mubr.f32.gmra.mxu0 %v45
  %v716 = vpop.f32.mrf.mxu0
  %v717 = vadd.f32 0.0, %v716
  %v718 = vpop.f32.mrf.mxu0
  %719 = vmatprep.mubr.f32.mxu0 0.0
  %720 = vmatmul.mubr.f32.gmra.mxu0 %v48
  %v721 = vpop.f32.mrf.mxu0
  %v722 = vadd.f32 0.0, %v721
  %v723 = vpop.f32.mrf.mxu0
  %724 = vmatprep.mubr.f32.mxu0 0.0
  %725 = vmatmul.mubr.f32.gmra.mxu0 %v51
  %v726 = vpop.f32.mrf.mxu0
  %v727 = vadd.f32 0.0, %v726
  %v728 = vpop.f32.mrf.mxu0
  %729 = vmatprep.mubr.f32.mxu0 0.0
  %730 = vmatmul.mubr.f32.gmra.mxu0 %v54
  %v731 = vpop.f32.mrf.mxu0
  %v732 = vadd.f32 0.0, %v731
  %v733 = vpop.f32.mrf.mxu0
  %734 = vmatprep.mubr.f32.mxu0 0.0
  %735 = vmatmul.mubr.f32.gmra.mxu0 %v57
  %v736 = vpop.f32.mrf.mxu0
  %v737 = vadd.f32 0.0, %v736
  %v738 = vpop.f32.mrf.mxu0
  %739 = vmatprep.mubr.f32.mxu0 0.0
  %740 = vmatmul.mubr.f32.gmra.mxu0 %v60
  %v741 = vpop.f32.mrf.mxu0
  %v742 = vadd.f32 0.0, %v741
  %v743 = vpop.f32.mrf.mxu0
  %744 = vdwg.mxu0
  %v746 = vsel %vm37, %v623, 0
  %v749 = vsel %vm37, %v624, 0
  %v752 = vsel %vm37, %v625, 0
  %v755 = vsel %vm37, %v626, 0
  %v758 = vsel %vm37, %v627, 0
  %v761 = vsel %vm37, %v628, 0
  %v764 = vsel %vm37, %v629, 0
  %v767 = vsel %vm37, %v630, 0
  %769 = vmatprep.subr.mxu0 0.0
  %770 = vmatpush1.msra.mxu0 0.0
  %771 = vmatprep.subr.mxu0 0.0
  %772 = vmatpush1.msra.mxu0 0.0
  %773 = vmatprep.subr.mxu0 0.0
  %774 = vmatpush1.msra.mxu0 0.0
  %775 = vmatprep.subr.mxu0 0.0
  %776 = vmatpush1.msra.mxu0 0.0
  %777 = vmatprep.subr.mxu0 0.0
  %778 = vmatpush1.msra.mxu0 0.0
  %779 = vmatprep.subr.mxu0 0.0
  %780 = vmatpush1.msra.mxu0 0.0
  %781 = vmatprep.subr.mxu0 0.0
  %782 = vmatpush1.msra.mxu0 0.0
  %783 = vmatprep.subr.mxu0 0.0
  %784 = vmatpush1.msra.mxu0 0.0
  %785 = vmatprep.subr.mxu0 0.0
  %786 = vmatpush1.msra.mxu0 0.0
  %787 = vmatprep.subr.mxu0 0.0
  %788 = vmatpush1.msra.mxu0 0.0
  %789 = vmatprep.subr.mxu0 0.0
  %790 = vmatpush1.msra.mxu0 0.0
  %791 = vmatprep.subr.mxu0 0.0
  %792 = vmatpush1.msra.mxu0 0.0
  %793 = vmatprep.subr.mxu0 0.0
  %794 = vmatpush1.msra.mxu0 %v634
  %795 = vmatprep.subr.mxu0 0.0
  %796 = vmatpush1.msra.mxu0 %v633
  %797 = vmatprep.subr.mxu0 0.0
  %798 = vmatpush1.msra.mxu0 %v632
  %799 = vmatprep.subr.mxu0 0.0
  %800 = vmatpush1.msra.mxu0 %v631
  %801 = vmatprep.subr.mxu0 0.0
  %802 = vmatpush2.msra.mxu0 0.0
  %803 = vmatprep.subr.mxu0 0.0
  %804 = vmatpush2.msra.mxu0 0.0
  %805 = vmatprep.subr.mxu0 0.0
  %806 = vmatpush2.msra.mxu0 0.0
  %807 = vmatprep.subr.mxu0 0.0
  %808 = vmatpush2.msra.mxu0 0.0
  %809 = vmatprep.subr.mxu0 0.0
  %810 = vmatpush2.msra.mxu0 0.0
  %811 = vmatprep.subr.mxu0 0.0
  %812 = vmatpush2.msra.mxu0 0.0
  %813 = vmatprep.subr.mxu0 0.0
  %814 = vmatpush2.msra.mxu0 0.0
  %815 = vmatprep.subr.mxu0 0.0
  %816 = vmatpush2.msra.mxu0 0.0
  %817 = vmatprep.subr.mxu0 0.0
  %818 = vmatpush2.msra.mxu0 0.0
  %819 = vmatprep.subr.mxu0 0.0
  %820 = vmatpush2.msra.mxu0 0.0
  %821 = vmatprep.subr.mxu0 0.0
  %822 = vmatpush2.msra.mxu0 0.0
  %823 = vmatprep.subr.mxu0 0.0
  %824 = vmatpush2.msra.mxu0 0.0
  %825 = vmatprep.subr.mxu0 0.0
  %826 = vmatpush2.msra.mxu0 0.0
  %827 = vmatprep.subr.mxu0 0.0
  %828 = vmatpush2.msra.mxu0 0.0
  %829 = vmatprep.subr.mxu0 0.0
  %830 = vmatpush2.msra.mxu0 0.0
  %831 = vmatprep.subr.mxu0 0.0
  %832 = vmatpush2.msra.mxu0 0.0
  %833 = vmatprep.mubr.f32.mxu0 0.0
  %834 = vmatmul.mubr.f32.gmra.mxu0 %v746
  %v835 = vpop.f32.mrf.mxu0
  %v836 = vadd.f32 %v707, %v835
  %v837 = vpop.f32.mrf.mxu0
  %838 = vmatprep.mubr.f32.mxu0 0.0
  %839 = vmatmul.mubr.f32.gmra.mxu0 %v749
  %v840 = vpop.f32.mrf.mxu0
  %v841 = vadd.f32 %v712, %v840
  %v842 = vpop.f32.mrf.mxu0
  %843 = vmatprep.mubr.f32.mxu0 0.0
  %844 = vmatmul.mubr.f32.gmra.mxu0 %v752
  %v845 = vpop.f32.mrf.mxu0
  %v846 = vadd.f32 %v717, %v845
  %v847 = vpop.f32.mrf.mxu0
  %848 = vmatprep.mubr.f32.mxu0 0.0
  %849 = vmatmul.mubr.f32.gmra.mxu0 %v755
  %v850 = vpop.f32.mrf.mxu0
  %v851 = vadd.f32 %v722, %v850
  %v852 = vpop.f32.mrf.mxu0
  %853 = vmatprep.mubr.f32.mxu0 0.0
  %854 = vmatmul.mubr.f32.gmra.mxu0 %v758
  %v855 = vpop.f32.mrf.mxu0
  %v856 = vadd.f32 %v727, %v855
  %v857 = vpop.f32.mrf.mxu0
  %858 = vmatprep.mubr.f32.mxu0 0.0
  %859 = vmatmul.mubr.f32.gmra.mxu0 %v761
  %v860 = vpop.f32.mrf.mxu0
  %v861 = vadd.f32 %v732, %v860
  %v862 = vpop.f32.mrf.mxu0
  %863 = vmatprep.mubr.f32.mxu0 0.0
  %864 = vmatmul.mubr.f32.gmra.mxu0 %v764
  %v865 = vpop.f32.mrf.mxu0
  %v866 = vadd.f32 %v737, %v865
  %v867 = vpop.f32.mrf.mxu0
  %868 = vmatprep.mubr.f32.mxu0 0.0
  %869 = vmatmul.mubr.f32.gmra.mxu0 %v767
  %v870 = vpop.f32.mrf.mxu0
  %v871 = vadd.f32 %v742, %v870
  %v872 = vpop.f32.mrf.mxu0
  %873 = vdwg.mxu0
  %v874 = vld [vmem:[%s4] sm:$0x1]
  %v876 = vlaneseq
  %v877 = vshrl.u32 %v876, 7
  %v878 = vsub.s32 0, %v877
  %v879 = vrot.slane %v874, %v878
  %v881 = vadd.f32 %v836, %v879
  %v882 = vadd.f32 %v841, %v879
  %v883 = vadd.f32 %v846, %v879
  %v884 = vadd.f32 %v851, %v879
  %v885 = vadd.f32 %v856, %v879
  %v886 = vadd.f32 %v861, %v879
  %v887 = vadd.f32 %v866, %v879
  %v888 = vadd.f32 %v871, %v879
  %vm889 = vcmask 130048
  %890 = vst.msk [vmem:[%s5] sm:$0xff] %vm889, %v881
  %891 = vst.msk [vmem:[%s5 + $0x8] sm:$0xff] %vm889, %v882
  %892 = vst.msk [vmem:[%s5 + $0x10] sm:$0xff] %vm889, %v883
  %893 = vst.msk [vmem:[%s5 + $0x18] sm:$0xff] %vm889, %v884
  %894 = vst.msk [vmem:[%s5 + $0x20] sm:$0xff] %vm889, %v885
  %895 = vst.msk [vmem:[%s5 + $0x28] sm:$0xff] %vm889, %v886
  %896 = vst.msk [vmem:[%s5 + $0x30] sm:$0xff] %vm889, %v887
  %897 = vst.msk [vmem:[%s5 + $0x38] sm:$0xff] %vm889, %v888
  // Predicated region
  $region22: #{tpu_custom_call.1} parent=0 // pred_check
    _
  $region23: #{tpu_custom_call.1} parent=0 // pred_check_branch
    %899 = sbr.rel (0) target = $region25
  $region24: #{tpu_custom_call.1} parent=0 // pred_region
    _
  $region25: #{tpu_custom_call.1} parent=0 // pred_fallthru
    _
  // Predicated region
  $region26: #{tpu_custom_call.1} parent=0 // pred_check
    _
  $region27: #{tpu_custom_call.1} parent=0 // pred_check_branch
    %901 = sbr.rel (0) target = $region29
  $region28: #{tpu_custom_call.1} parent=0 // pred_region
    _
  $region29: #{tpu_custom_call.1} parent=0 // pred_fallthru
    _

</llo_original>
